<compile_context>
chip_gen: v7x
topology: tpu7x:2x2x1
jax: 0.10.0
libtpu: 0.0.40
codegen_flags: <defaults>
</compile_context>

<pallas_src>
import jax
import jax.numpy as jnp
from jax.experimental import pallas as pl
from jax.experimental.pallas import tpu as pltpu


def attention_net_kernel(x_ref, w1_ref, b1_ref, w2_ref, b2_ref, o_ref):
    # In-kernel cast to bf16 for the MXU (VPU cast hides under the x DMA).
    x = x_ref[...].astype(jnp.bfloat16)                       # (tm, D)
    # fc1 on the MXU, batch-on-lanes: (H, D) contract (tm, D) -> (H, tm), f32 acc.
    h = jax.lax.dot_general(
        w1_ref[...], x,
        dimension_numbers=(((1,), (1,)), ((), ())),
        preferred_element_type=jnp.float32)                   # (H, tm)
    # Bias + ReLU: lane-dense VPU work, bias broadcast along lanes.
    h = jnp.maximum(h + b1_ref[...], 0.0)                     # (H, tm)
    # fc2 (output width 1): VPU multiply by scale*W2 column + sublane reduce.
    y = jnp.sum(h * w2_ref[...], axis=0, keepdims=True)       # (1, tm) lane-dense
    o_ref[...] = (y + b2_ref[0, 0]).astype(o_ref.dtype)


def prepare_params(w1, b1, w2, b2, scale_factor):
    """Convert nn.Linear-layout params to kernel layout.

    w1: [H, D], b1: [H], w2: [1, H], b2: [1]  (PyTorch nn.Linear layout).
    Returns:
      w1_hd  [H, D]  bf16 (MXU operand, hidden-on-sublanes layout)
      b1_col [H, 1]  f32
      w2_col [H, 1]  f32, scale_factor folded in
      b2_s   [1, 1]  f32, scale_factor folded in (goes to SMEM)
    """
    scale = jnp.float32(scale_factor)
    w1_hd = w1.astype(jnp.bfloat16)
    b1_col = b1.reshape(-1, 1).astype(jnp.float32)
    w2_col = (scale * w2.astype(jnp.float32)).reshape(-1, 1)
    b2_s = (scale * b2.astype(jnp.float32)).reshape(1, 1)
    return w1_hd, b1_col, w2_col, b2_s


def _round_up(v, m):
    return ((v + m - 1) // m) * m


def attention_net_forward(x, w1_hd, b1_col, w2_col, b2_s, *, block_rows=8192):
    """x: [N, D] f32 (bf16 also fine). Returns [N, 1] f32."""
    n, d = x.shape
    hdim = w1_hd.shape[0]

    # Tile size: multiple of 128 (lane-dense output), clamped so the grid has
    # >= 2 tiles when N is large enough (v7x megacore balance).
    tm = max(128, _round_up(int(block_rows), 128))
    half_rounded = _round_up(max(1, -(-n // 2)), 128)
    tm = max(128, min(tm, half_rounded))
    n_tiles = -(-n // tm)

    out_row = pl.pallas_call(
        attention_net_kernel,
        out_shape=jax.ShapeDtypeStruct((1, n), jnp.float32),
        grid_spec=pltpu.PrefetchScalarGridSpec(
            num_scalar_prefetch=0,
            grid=(n_tiles,),
            in_specs=[
                pl.BlockSpec((tm, d), lambda i: (i, 0)),       # x row tile (pipelined)
                pl.BlockSpec((hdim, d), lambda i: (0, 0)),     # W1 (resident)
                pl.BlockSpec((hdim, 1), lambda i: (0, 0)),     # b1 column (resident)
                pl.BlockSpec((hdim, 1), lambda i: (0, 0)),     # scale*W2 column (resident)
                pl.BlockSpec(memory_space=pltpu.MemorySpace.SMEM),  # scale*b2 scalar
            ],
            out_specs=pl.BlockSpec((1, tm), lambda i: (0, i)),  # lane-dense slab
        ),
        compiler_params=pltpu.CompilerParams(
            dimension_semantics=("parallel",),   # megacore split on v7x
        ),
        cost_estimate=pl.CostEstimate(
            flops=2 * n * d * hdim,
            transcendentals=0,
            bytes_accessed=n * d * x.dtype.itemsize + n * 4
            + hdim * d * 2 + hdim * 8,
        ),
    )(x, w1_hd, b1_col, w2_col, b2_s)

    return out_row.reshape(n, 1)


def reference_forward(x, w1, b1, w2, b2, scale_factor):
    """Pure-f32 JAX reference matching the PyTorch module."""
    h = jnp.maximum(x @ w1.T + b1, 0.0)
    return scale_factor * (h @ w2.T + b2)


if __name__ == "__main__":
    input_dim = 16
    hidden_dim = 32
    scale_factor = 2.0
    batch = 8

    key = jax.random.PRNGKey(0)
    kx, k1, k2, k3, k4, kx2 = jax.random.split(key, 6)
    x = jax.random.normal(kx, (batch, input_dim), jnp.float32)
    w1 = jax.random.normal(k1, (hidden_dim, input_dim), jnp.float32) * 0.1
    b1 = jax.random.normal(k2, (hidden_dim,), jnp.float32) * 0.1
    w2 = jax.random.normal(k3, (1, hidden_dim), jnp.float32) * 0.1
    b2 = jax.random.normal(k4, (1,), jnp.float32) * 0.1

    params = prepare_params(w1, b1, w2, b2, scale_factor)

    # Small check (single, partial tile: batch < 128).
    out = attention_net_forward(x, *params)
    out = jax.block_until_ready(out)
    ref = reference_forward(x, w1, b1, w2, b2, scale_factor)
    assert out.shape == (batch, 1)
    # bf16 fc1 operands -> loose tolerance vs. the pure-f32 reference.
    assert jnp.allclose(out, ref, atol=5e-2, rtol=5e-2), "mismatch vs JAX reference"

    # Multi-tile check (grid > 1, ragged final tile, no wrapper pad).
    x_big = jax.random.normal(kx2, (1000, input_dim), jnp.float32)
    out_big = jax.block_until_ready(attention_net_forward(x_big, *params))
    ref_big = reference_forward(x_big, w1, b1, w2, b2, scale_factor)
    assert out_big.shape == (1000, 1)
    assert jnp.allclose(out_big, ref_big, atol=5e-2, rtol=5e-2), "tiled mismatch"

    print("KERNEL_OK")
</pallas_src>

<mosaic_0001>
module attributes {stable_mosaic.version = 11 : i64} {
  func.func @attention_net_kernel(%arg0: i32, %arg1: memref<128x16xf32, #tpu.memory_space<vmem>>, %arg2: memref<32x16xbf16, #tpu.memory_space<vmem>>, %arg3: memref<32x1xf32, #tpu.memory_space<vmem>>, %arg4: memref<32x1xf32, #tpu.memory_space<vmem>>, %arg5: memref<1x1xf32, #tpu.memory_space<smem>>, %arg6: memref<1x128xf32, #tpu.memory_space<vmem>>) attributes {dimension_semantics = [#tpu.dimension_semantics<parallel>], iteration_bounds = array<i64: 1>, scalar_prefetch = 0 : i64, scratch_operands = 0 : i64, tpu.core_type = #tpu.core_type<tc>, window_params = [{transform_indices = @transform_0, window_bounds = array<i64: 128, 16>}, {pipeline_mode = #tpu.pipeline_mode<synchronous>, transform_indices = @transform_1, window_bounds = array<i64: 32, 16>}, {pipeline_mode = #tpu.pipeline_mode<synchronous>, transform_indices = @transform_2, window_bounds = array<i64: 32, 1>}, {pipeline_mode = #tpu.pipeline_mode<synchronous>, transform_indices = @transform_3, window_bounds = array<i64: 32, 1>}, {transform_indices = @transform_4, window_bounds = array<i64: 1, 1>}, {transform_indices = @transform_5, window_bounds = array<i64: 1, 128>}]} {
    %c0 = arith.constant 0 : index
    %c0_0 = arith.constant 0 : index
    %0 = vector.load %arg1[%c0, %c0_0] : memref<128x16xf32, #tpu.memory_space<vmem>>, vector<128x16xf32>
    %1 = arith.truncf %0 : vector<128x16xf32> to vector<128x16xbf16>
    %c0_1 = arith.constant 0 : index
    %c0_2 = arith.constant 0 : index
    %2 = vector.load %arg2[%c0_1, %c0_2] : memref<32x16xbf16, #tpu.memory_space<vmem>>, vector<32x16xbf16>
    %cst = arith.constant dense<0.000000e+00> : vector<32x128xf32>
    %3 = tpu.matmul %2, %1, %cst {dimension_numbers = #tpu.dot_dimension_numbers<[1], [1], [0], [0], [0, 0, 1, 0], [], []>} : vector<32x16xbf16>, vector<128x16xbf16>, vector<32x128xf32> -> vector<32x128xf32>
    %c0_3 = arith.constant 0 : index
    %c0_4 = arith.constant 0 : index
    %4 = vector.load %arg3[%c0_3, %c0_4] : memref<32x1xf32, #tpu.memory_space<vmem>>, vector<32x1xf32>
    %5 = vector.broadcast %4 : vector<32x1xf32> to vector<32x128xf32>
    %6 = arith.addf %3, %5 : vector<32x128xf32>
    %cst_5 = arith.constant 0.000000e+00 : f32
    %7 = vector.broadcast %cst_5 : f32 to vector<32x128xf32>
    %8 = arith.maximumf %6, %7 : vector<32x128xf32>
    %c0_6 = arith.constant 0 : index
    %c0_7 = arith.constant 0 : index
    %9 = vector.load %arg4[%c0_6, %c0_7] : memref<32x1xf32, #tpu.memory_space<vmem>>, vector<32x1xf32>
    %10 = vector.broadcast %9 : vector<32x1xf32> to vector<32x128xf32>
    %11 = arith.mulf %8, %10 : vector<32x128xf32>
    %cst_8 = arith.constant dense<0.000000e+00> : vector<128xf32>
    %12 = vector.multi_reduction <add>, %11, %cst_8 [0] : vector<32x128xf32> to vector<128xf32>
    %13 = vector.shape_cast %12 : vector<128xf32> to vector<1x128xf32>
    %c0_9 = arith.constant 0 : index
    %c0_10 = arith.constant 0 : index
    %14 = memref.load %arg5[%c0_9, %c0_10] : memref<1x1xf32, #tpu.memory_space<smem>>
    %15 = vector.broadcast %14 : f32 to vector<1x128xf32>
    %16 = arith.addf %13, %15 : vector<1x128xf32>
    %c0_11 = arith.constant 0 : index
    %c0_12 = arith.constant 0 : index
    %17 = vector.load %arg6[%c0_11, %c0_12] : memref<1x128xf32, #tpu.memory_space<vmem>>, vector<1x128xf32>
    tpu.vector_store %arg6[%c0_11, %c0_12], %16 {strides = array<i32>} : memref<1x128xf32, #tpu.memory_space<vmem>>, vector<1x128xf32>,
    return
  }
  func.func @transform_0(%arg0: i32) -> (i32, i32) {
    %c0_i32 = arith.constant 0 : i32
    %c0_i32_0 = arith.constant 0 : i32
    return %arg0, %c0_i32 : i32, i32
  }
  func.func @transform_1(%arg0: i32) -> (i32, i32) {
    %c0_i32 = arith.constant 0 : i32
    %c0_i32_0 = arith.constant 0 : i32
    %c0_i32_1 = arith.constant 0 : i32
    return %c0_i32, %c0_i32_0 : i32, i32
  }
  func.func @transform_2(%arg0: i32) -> (i32, i32) {
    %c0_i32 = arith.constant 0 : i32
    %c0_i32_0 = arith.constant 0 : i32
    %c0_i32_1 = arith.constant 0 : i32
    return %c0_i32, %c0_i32_0 : i32, i32
  }
  func.func @transform_3(%arg0: i32) -> (i32, i32) {
    %c0_i32 = arith.constant 0 : i32
    %c0_i32_0 = arith.constant 0 : i32
    %c0_i32_1 = arith.constant 0 : i32
    return %c0_i32, %c0_i32_0 : i32, i32
  }
  func.func @transform_4(%arg0: i32) -> (i32, i32) {
    %c0_i32 = arith.constant 0 : i32
    %c0_i32_0 = arith.constant 0 : i32
    %c0_i32_1 = arith.constant 0 : i32
    return %c0_i32, %c0_i32_0 : i32, i32
  }
  func.func @transform_5(%arg0: i32) -> (i32, i32) {
    %c0_i32 = arith.constant 0 : i32
    %c0_i32_0 = arith.constant 0 : i32
    return %c0_i32, %arg0 : i32, i32
  }
}

</mosaic_0001>

<llo_original>
// kernel: tpu_custom_call.1
$region0: #{tpu_custom_call.1}
  #allocation0 [shape = 'u32[]', space=smem, size = 0x4, offset = 0x4, fixed_abs, tag = 'smem constant byte address 0x4 - core index']
  #allocation1 [shape = 'u32[144,128]{1,0:T(1,128)}', space=vmem, size = 0x12000, scoped, tag = 'internal scratch']
  #allocation2 [shape = 'f32[1,1]{1,0:T(1,128)S(6)}', space=smem, size = 0x200, scoped, tag = 'scoped memory for tpu_custom_call.1']
  %s0 = inlined_call_operand.vmem [shape: f32[8,16], index: 0, kind: input, shape index: {}]
  %s1 = inlined_call_operand.vmem [shape: bf16[32,16], index: 1, kind: input, shape index: {}]
  %s2 = inlined_call_operand.vmem [shape: f32[32,1], index: 2, kind: input, shape index: {}]
  %s3 = inlined_call_operand.vmem [shape: f32[32,1], index: 3, kind: input, shape index: {}]
  %s4 = inlined_call_operand.<no memory space> [shape: f32[1,1], index: 4, kind: input, shape index: {}]
  %s5 = inlined_call_operand.hbm [shape: f32[1,8], index: 5, kind: output, shape index: {}]
  %s6 = sld [smem:[#allocation0]]
  $region30: #{tpu_custom_call.1} parent=0
    _
  %s8 = ssub.s32 1, %s6
  %s9 = scalar_select 0, %s8, %s6
  %10 = sst [smem:[#allocation2]] %s4
  $region1: #{tpu_custom_call.1} parent=0
    #allocation3 [shape = 'u8[512]{0}', space=vmem, size = 0x400, scoped, tag = 'output window, operand 0, single buffered']
    #allocation4 [shape = 's32[1]{0}', space=sflag, size = 0x4, scoped, tag = 'scoped memory for tpu_custom_call.1']
    %11 = vsyncpa [#allocation4], 0
    // Predicated region
    $region2: #{tpu_custom_call.1} parent=1 // pred_check
      _
    $region3: #{tpu_custom_call.1} parent=1 // pred_check_branch
      %13 = sbr.rel (0) target = $region5
    $region4: #{tpu_custom_call.1} parent=1 // pred_region
      _
    $region5: #{tpu_custom_call.1} parent=1 // pred_fallthru
      _
    // Predicated region
    $region6: #{tpu_custom_call.1} parent=1 // pred_check
      _
    $region7: #{tpu_custom_call.1} parent=1 // pred_check_branch
      %15 = sbr.rel (0) target = $region9
    $region8: #{tpu_custom_call.1} parent=1 // pred_region
      _
    $region9: #{tpu_custom_call.1} parent=1 // pred_fallthru
      _
    // Predicated region
    $region10: #{tpu_custom_call.1} parent=1 // pred_check
      _
    $region11: #{tpu_custom_call.1} parent=1 // pred_check_branch
      %17 = sbr.rel (0) target = $region13
    $region12: #{tpu_custom_call.1} parent=1 // pred_region
      _
    $region13: #{tpu_custom_call.1} parent=1 // pred_fallthru
      _
    // Predicated region
    $region14: #{tpu_custom_call.1} parent=1 // pred_check
      _
    $region15: #{tpu_custom_call.1} parent=1 // pred_check_branch
      %19 = sbr.rel (0) target = $region17
    $region16: #{tpu_custom_call.1} parent=1 // pred_region
      _
    $region17: #{tpu_custom_call.1} parent=1 // pred_fallthru
      _
    // Predicated region
    $region18: #{tpu_custom_call.1} parent=1 // pred_check
      _
    $region19: #{tpu_custom_call.1} parent=1 // pred_check_branch
      %21 = sbr.rel (0) target = $region21
    $region20: #{tpu_custom_call.1} parent=1 // pred_region
      _
    $region21: #{tpu_custom_call.1} parent=1 // pred_fallthru
      _
    %v23 = vld [vmem:[%s0] sm:$0xff]
    %v24 = vld [vmem:[%s0 + $0x8] sm:$0xff]
    %v25 = vld [vmem:[%s0 + $0x10] sm:$0xff]
    %v26 = vld [vmem:[%s0 + $0x18] sm:$0xff]
    %v27 = vld [vmem:[%s0 + $0x20] sm:$0xff]
    %v28 = vld [vmem:[%s0 + $0x28] sm:$0xff]
    %v29 = vld [vmem:[%s0 + $0x30] sm:$0xff]
    %v30 = vld [vmem:[%s0 + $0x38] sm:$0xff]
    %v31 = vld [vmem:[%s0 + $0x40] sm:$0xff]
    %v32 = vld [vmem:[%s0 + $0x48] sm:$0xff]
    %v33 = vld [vmem:[%s0 + $0x50] sm:$0xff]
    %v34 = vld [vmem:[%s0 + $0x58] sm:$0xff]
    %v35 = vld [vmem:[%s0 + $0x60] sm:$0xff]
    %v36 = vld [vmem:[%s0 + $0x68] sm:$0xff]
    %v37 = vld [vmem:[%s0 + $0x70] sm:$0xff]
    %v38 = vld [vmem:[%s0 + $0x78] sm:$0xff]
    %v39 = vpack.c.bf16 %v24, %v23
    %v40 = vpack.c.bf16 %v26, %v25
    %v41 = vpack.c.bf16 %v28, %v27
    %v42 = vpack.c.bf16 %v30, %v29
    %v43 = vpack.c.bf16 %v32, %v31
    %v44 = vpack.c.bf16 %v34, %v33
    %v45 = vpack.c.bf16 %v36, %v35
    %v46 = vpack.c.bf16 %v38, %v37
    %v47 = vld [vmem:[%s1] sm:$0xf]
    %v48 = vld [vmem:[%s1 + $0x4] sm:$0xf]
    %v49 = vld [vmem:[%s1 + $0x8] sm:$0xf]
    %v50 = vld [vmem:[%s1 + $0xc] sm:$0xf]
    %v51 = vld [vmem:[%s2] sm:$0xff]
    %v52 = vld [vmem:[%s2 + $0x8] sm:$0xff]
    %v53 = vld [vmem:[%s2 + $0x10] sm:$0xff]
    %v54 = vld [vmem:[%s2 + $0x18] sm:$0xff]
    %56 = vset.pattern.permute.xlu0 0
    %57 = vperm.xlu0 %56, %v51
    %v58 = vpop.permute.xlu0 %57
    %61 = vset.pattern.permute.xlu0 0
    %62 = vperm.xlu0 %61, %v52
    %v63 = vpop.permute.xlu0 %62
    %66 = vset.pattern.permute.xlu0 0
    %67 = vperm.xlu0 %66, %v53
    %v68 = vpop.permute.xlu0 %67
    %71 = vset.pattern.permute.xlu0 0
    %72 = vperm.xlu0 %71, %v54
    %v73 = vpop.permute.xlu0 %72
    %v79 = vunpack.c.l.b16 %v47
    %v80 = vunpack.c.l.b16 %v48
    %v81 = vunpack.c.l.b16 %v49
    %v82 = vunpack.c.l.b16 %v50
    %v83 = vpack.c.b16 %v80, %v79
    %v84 = vpack.c.b16 %v82, %v81
    %vm85 = vcmask 130048
    %v87 = vsel %vm85, %v83, 0
    %v90 = vsel %vm85, %v84, 0
    %v93 = vsel %vm85, %v39, 0
    %v96 = vsel %vm85, %v40, 0
    %v99 = vsel %vm85, %v41, 0
    %v102 = vsel %vm85, %v42, 0
    %v105 = vsel %vm85, %v43, 0
    %v108 = vsel %vm85, %v44, 0
    %v111 = vsel %vm85, %v45, 0
    %v114 = vsel %vm85, %v46, 0
    %116 = vmatprep.subr.bf16.mxu0 0
    %117 = vmatpush1.bf16.xpose.msra.mxu0 %v93
    %118 = vmatprep.subr.bf16.mxu0 0
    %119 = vmatpush1.bf16.xpose.msra.mxu0 %v96
    %120 = vmatprep.subr.bf16.mxu0 0
    %121 = vmatpush1.bf16.xpose.msra.mxu0 %v99
    %122 = vmatprep.subr.bf16.mxu0 0
    %123 = vmatpush1.bf16.xpose.msra.mxu0 %v102
    %124 = vmatprep.subr.bf16.mxu0 0
    %125 = vmatpush1.bf16.xpose.msra.mxu0 %v105
    %126 = vmatprep.subr.bf16.mxu0 0
    %127 = vmatpush1.bf16.xpose.msra.mxu0 %v108
    %128 = vmatprep.subr.bf16.mxu0 0
    %129 = vmatpush1.bf16.xpose.msra.mxu0 %v111
    %130 = vmatprep.subr.bf16.mxu0 0
    %131 = vmatpush1.bf16.xpose.msra.mxu0 %v114
    %132 = vmatprep.subr.bf16.mxu0 0
    %133 = vmatpush1.bf16.xpose.msra.mxu0 0
    %134 = vmatprep.subr.bf16.mxu0 0
    %135 = vmatpush1.bf16.xpose.msra.mxu0 0
    %136 = vmatprep.subr.bf16.mxu0 0
    %137 = vmatpush1.bf16.xpose.msra.mxu0 0
    %138 = vmatprep.subr.bf16.mxu0 0
    %139 = vmatpush1.bf16.xpose.msra.mxu0 0
    %140 = vmatprep.subr.bf16.mxu0 0
    %141 = vmatpush1.bf16.xpose.msra.mxu0 0
    %142 = vmatprep.subr.bf16.mxu0 0
    %143 = vmatpush1.bf16.xpose.msra.mxu0 0
    %144 = vmatprep.subr.bf16.mxu0 0
    %145 = vmatpush1.bf16.xpose.msra.mxu0 0
    %146 = vmatprep.subr.bf16.mxu0 0
    %147 = vmatpush1.bf16.xpose.msra.mxu0 0
    %148 = vmatprep.mubr.bf16.mxu0 0
    %149 = vmatmul.mubr.bf16.gmra.mrb[0].mxu0 %v87
    %v150 = vpop.f32.mrb[0].mxu0
    %v151 = vadd.f32 %v58, %v150
    %v152 = vpop.f32.mrb[0].mxu0
    %v153 = vpop.f32.mrb[0].mxu0
    %v154 = vadd.f32 %v63, %v153
    %v155 = vpop.f32.mrb[0].mxu0
    %156 = vmatprep.mubr.bf16.mxu0 0
    %157 = vmatmul.mubr.bf16.gmra.mrb[0].mxu0 %v90
    %v158 = vpop.f32.mrb[0].mxu0
    %v159 = vadd.f32 %v68, %v158
    %v160 = vpop.f32.mrb[0].mxu0
    %v161 = vpop.f32.mrb[0].mxu0
    %v162 = vadd.f32 %v73, %v161
    %v163 = vpop.f32.mrb[0].mxu0
    %164 = vdwg.mxu0
    %v165 = vmax.f32 %v151, 0.0
    %v166 = vmax.f32 %v154, 0.0
    %v167 = vmax.f32 %v159, 0.0
    %v168 = vmax.f32 %v162, 0.0
    %v169 = vld [vmem:[%s3] sm:$0xff]
    %v170 = vld [vmem:[%s3 + $0x8] sm:$0xff]
    %v171 = vld [vmem:[%s3 + $0x10] sm:$0xff]
    %v172 = vld [vmem:[%s3 + $0x18] sm:$0xff]
    %174 = vset.pattern.permute.xlu0 0
    %175 = vperm.xlu0 %174, %v169
    %v176 = vpop.permute.xlu0 %175
    %179 = vset.pattern.permute.xlu0 0
    %180 = vperm.xlu0 %179, %v170
    %v181 = vpop.permute.xlu0 %180
    %184 = vset.pattern.permute.xlu0 0
    %185 = vperm.xlu0 %184, %v171
    %v186 = vpop.permute.xlu0 %185
    %189 = vset.pattern.permute.xlu0 0
    %190 = vperm.xlu0 %189, %v172
    %v191 = vpop.permute.xlu0 %190
    %v193 = vmul.f32 %v165, %v176
    %v194 = vmul.f32 %v166, %v181
    %v195 = vmul.f32 %v167, %v186
    %v196 = vmul.f32 %v168, %v191
    %v197 = vadd.f32 %v193, %v194
    %v198 = vadd.f32 %v197, %v195
    %v199 = vadd.f32 %v198, %v196
    %v200 = vrot.slane %v199, 4
    %v201 = vadd.f32 %v199, %v200
    %v202 = vrot.slane %v201, 2
    %v203 = vadd.f32 %v201, %v202
    %v204 = vrot.slane %v203, 1
    %v205 = vadd.f32 %v203, %v204
    %s206 = sld [smem:[#allocation2]]
    %v207 = vstv %s206
    %v208 = vadd.f32 %v205, %v207
    %209 = vst [vmem:[#allocation3] sm:$0x1] %v208
    // Predicated region
    $region22: #{tpu_custom_call.1} parent=1 // pred_check
      _
    $region23: #{tpu_custom_call.1} parent=1 // pred_check_branch
      %211 = sbr.rel (0) target = $region25
    $region24: #{tpu_custom_call.1} parent=1 // pred_region
      %s213 = ssub.s32 16, 16
      %214 = vsyncadd [#allocation4], %s213
      %s216 = sshll.u32 [#allocation3], 4
      %s217 = int_to_ptr.vmem [resolvable:$true] %s216
      %219 = dma.vmem_to_hbm [thread:$0]  %s217, 16, %s5, [#allocation4]
    $region25: #{tpu_custom_call.1} parent=1 // pred_fallthru
      _
    // Predicated region
    $region26: #{tpu_custom_call.1} parent=1 // pred_check
      _
    $region27: #{tpu_custom_call.1} parent=1 // pred_check_branch
      %221 = sbr.rel (0) target = $region29
    $region28: #{tpu_custom_call.1} parent=1 // pred_region
      %222 = dma.done [#allocation4], 16
    $region29: #{tpu_custom_call.1} parent=1 // pred_fallthru
      _
    %223 = vsyncpa [#allocation4], 1

</llo_original>
